<compile_context>
chip_gen: v6e
topology: v6e:2x2x1
jax: 0.10.0
libtpu: 0.0.40
codegen_flags: <defaults>
</compile_context>

<pallas_src>
import functools

import jax
import jax.numpy as jnp
from jax.experimental import pallas as pl
from jax.experimental.pallas import tpu as pltpu


def eta_mlp_kernel(x_ref, w0_ref, b0_ref, w1_ref, b1_ref, wo_ref, bo_ref,
                   o_ref, *, compute_dtype=None):
    """One batch tile of the EtaMLP forward.

    x_ref : (tile_b, D)
    w0_ref: (D, H)   b0_ref: (1, H)
    w1_ref: (H, H)   b1_ref: (1, H)
    wo_ref: (1, H)   (output weight passed as a row)
    bo_ref: (1, 1)
    o_ref : (tile_b, 1)
    """
    x = x_ref[...]
    w0 = w0_ref[...]
    w1 = w1_ref[...]
    if compute_dtype is not None:
        # In-kernel cast (VPU) -- no extra HBM pass, bf16 MXU operand rate.
        x = x.astype(compute_dtype)
        w0 = w0.astype(compute_dtype)
        w1 = w1.astype(compute_dtype)

    # Hidden layer 0: Linear + ReLU (MXU matmul, f32 accumulation).
    h = jnp.dot(x, w0, preferred_element_type=jnp.float32)
    h = jnp.maximum(h + b0_ref[...], 0.0)

    # Hidden layer 1: Linear + ReLU.
    if compute_dtype is not None:
        h = h.astype(compute_dtype)
    h = jnp.dot(h, w1, preferred_element_type=jnp.float32)
    h = jnp.maximum(h + b1_ref[...], 0.0)

    # Output layer (H -> 1): VPU multiply + lane reduce, then softplus.
    z = jnp.sum(h * wo_ref[...], axis=-1, keepdims=True) + bo_ref[...]
    o_ref[...] = jax.nn.softplus(z).astype(o_ref.dtype)


def _round_up(n, m):
    return ((n + m - 1) // m) * m


def _num_tensorcores():
    """TensorCores the grid's 'parallel' axis can shard across: 2 on v7x and
    megacore chips (v4/v5p), 1 on v5e/v6e. Heuristic only affects perf."""
    try:
        kind = jax.devices()[0].device_kind.lower()
    except Exception:
        return 1
    for tag in ("v7", "v4", "v5p"):
        if tag in kind:
            return 2
    return 1


def _choose_tile_b(B, n_tc):
    """Batch-tile rows: multiple of 8 (f32 sublanes), capped at 4096 rows
    (double-buffered (4096,32) f32 tile = ~1 MiB, far under VMEM on all
    generations). Single grid step on 1-TC chips; even >=2 steps on 2-TC
    chips so both cores get balanced tiles."""
    cap = 4096
    b8 = _round_up(B, 8)
    steps = pl.cdiv(b8, cap)
    if n_tc >= 2:
        steps = max(steps, 2)
        if steps % 2:
            steps += 1
    tile = _round_up(pl.cdiv(b8, steps), 8)
    return min(tile, cap)


def temperature_forward(x, params, *, tile_b=None, compute_dtype=None):
    """x: (B, in_dim). Returns (B, 1) temperature (softplus(EtaMLP(x)))."""
    w0, b0, w1, b1, wo, bo = params
    B, D = x.shape
    H = w0.shape[1]

    if tile_b is None:
        tile_b = _choose_tile_b(B, _num_tensorcores())
    tile_b = _round_up(tile_b, 8)

    wo_row = wo.reshape(1, H)   # output weight as a row for the VPU path
    grid_b = pl.cdiv(B, tile_b)

    kernel = functools.partial(eta_mlp_kernel, compute_dtype=compute_dtype)

    out = pl.pallas_call(
        kernel,
        out_shape=jax.ShapeDtypeStruct((B, 1), jnp.float32),
        grid=(grid_b,),
        in_specs=[
            pl.BlockSpec((tile_b, D), lambda i: (i, 0)),   # x tile (pipelined)
            pl.BlockSpec((D, H), lambda i: (0, 0)),        # W0 (VMEM resident)
            pl.BlockSpec((1, H), lambda i: (0, 0)),        # b0
            pl.BlockSpec((H, H), lambda i: (0, 0)),        # W1
            pl.BlockSpec((1, H), lambda i: (0, 0)),        # b1
            pl.BlockSpec((1, H), lambda i: (0, 0)),        # Wout (row)
            pl.BlockSpec((1, 1), lambda i: (0, 0)),        # bout
        ],
        out_specs=pl.BlockSpec((tile_b, 1), lambda i: (i, 0)),
        compiler_params=pltpu.CompilerParams(
            dimension_semantics=("parallel",)),
    )(x, w0, b0, w1, b1, wo_row, bo)

    return out


def init_params(key, in_dim, hidden_dim):
    """Deterministic params matching EtaMLP shapes (n_hidden=2, out_dim=1)."""
    k0, k1, k2 = jax.random.split(key, 3)
    s0 = 1.0 / jnp.sqrt(in_dim)
    s1 = 1.0 / jnp.sqrt(hidden_dim)
    w0 = jax.random.uniform(k0, (in_dim, hidden_dim), jnp.float32, -s0, s0)
    b0 = jnp.zeros((1, hidden_dim), jnp.float32)
    w1 = jax.random.uniform(k1, (hidden_dim, hidden_dim), jnp.float32, -s1, s1)
    b1 = jnp.zeros((1, hidden_dim), jnp.float32)
    wo = jax.random.uniform(k2, (hidden_dim, 1), jnp.float32, -s1, s1)
    bo = jnp.zeros((1, 1), jnp.float32)
    return (w0, b0, w1, b1, wo, bo)


def reference_forward(x, params):
    w0, b0, w1, b1, wo, bo = params
    h = jnp.maximum(x @ w0 + b0, 0.0)
    h = jnp.maximum(h @ w1 + b1, 0.0)
    return jax.nn.softplus(h @ wo + bo)


if __name__ == "__main__":
    key = jax.random.PRNGKey(0)
    kx, kp, kx2 = jax.random.split(key, 3)

    batch = 8          # observation batch
    in_dim = 32        # encoder output size ("size" from encoder.initialize)
    hidden_dim = 32    # EtaMLP hidden width (n_hidden = 2)

    x = jax.random.normal(kx, (batch, in_dim), dtype=jnp.float32)
    params = init_params(kp, in_dim, hidden_dim)

    # f32 path, small batch (single grid step everywhere).
    out = jax.block_until_ready(temperature_forward(x, params))
    ref = reference_forward(x, params)
    assert out.shape == (batch, 1)
    assert jnp.allclose(out, ref, atol=1e-5, rtol=1e-5), "mismatch vs reference"

    # f32 path, B not a multiple of tile_b -> partial last block (no pad/slice).
    batch2 = 300
    x2 = jax.random.normal(kx2, (batch2, in_dim), dtype=jnp.float32)
    out2 = jax.block_until_ready(temperature_forward(x2, params))
    ref2 = reference_forward(x2, params)
    assert out2.shape == (batch2, 1)
    assert jnp.allclose(out2, ref2, atol=1e-5, rtol=1e-5), "mismatch (partial block)"

    # bf16 in-kernel-cast path (f32 accumulation); relaxed tolerance.
    out3 = jax.block_until_ready(
        temperature_forward(x2, params, compute_dtype=jnp.bfloat16))
    assert out3.shape == (batch2, 1)
    assert jnp.all(jnp.isfinite(out3))
    assert jnp.allclose(out3, ref2, atol=1e-1, rtol=1e-1), "mismatch (bf16 path)"

    print("KERNEL_OK")
</pallas_src>

<mosaic_0001>
module attributes {stable_mosaic.version = 11 : i64} {
  func.func @eta_mlp_kernel(%arg0: i32, %arg1: memref<8x32xf32, #tpu.memory_space<vmem>>, %arg2: memref<32x32xf32, #tpu.memory_space<vmem>>, %arg3: memref<1x32xf32, #tpu.memory_space<vmem>>, %arg4: memref<32x32xf32, #tpu.memory_space<vmem>>, %arg5: memref<1x32xf32, #tpu.memory_space<vmem>>, %arg6: memref<1x32xf32, #tpu.memory_space<vmem>>, %arg7: memref<1x1xf32, #tpu.memory_space<vmem>>, %arg8: memref<8x1xf32, #tpu.memory_space<vmem>>) attributes {dimension_semantics = [#tpu.dimension_semantics<parallel>], iteration_bounds = array<i64: 1>, scalar_prefetch = 0 : i64, scratch_operands = 0 : i64, tpu.core_type = #tpu.core_type<tc>, window_params = [{transform_indices = @transform_0, window_bounds = array<i64: 8, 32>}, {pipeline_mode = #tpu.pipeline_mode<synchronous>, transform_indices = @transform_1, window_bounds = array<i64: 32, 32>}, {pipeline_mode = #tpu.pipeline_mode<synchronous>, transform_indices = @transform_2, window_bounds = array<i64: 1, 32>}, {pipeline_mode = #tpu.pipeline_mode<synchronous>, transform_indices = @transform_3, window_bounds = array<i64: 32, 32>}, {pipeline_mode = #tpu.pipeline_mode<synchronous>, transform_indices = @transform_4, window_bounds = array<i64: 1, 32>}, {pipeline_mode = #tpu.pipeline_mode<synchronous>, transform_indices = @transform_5, window_bounds = array<i64: 1, 32>}, {pipeline_mode = #tpu.pipeline_mode<synchronous>, transform_indices = @transform_6, window_bounds = array<i64: 1, 1>}, {transform_indices = @transform_7, window_bounds = array<i64: 8, 1>}]} {
    %c0 = arith.constant 0 : index
    %c0_0 = arith.constant 0 : index
    %0 = vector.load %arg1[%c0, %c0_0] : memref<8x32xf32, #tpu.memory_space<vmem>>, vector<8x32xf32>
    %c0_1 = arith.constant 0 : index
    %c0_2 = arith.constant 0 : index
    %1 = vector.load %arg2[%c0_1, %c0_2] : memref<32x32xf32, #tpu.memory_space<vmem>>, vector<32x32xf32>
    %c0_3 = arith.constant 0 : index
    %c0_4 = arith.constant 0 : index
    %2 = vector.load %arg4[%c0_3, %c0_4] : memref<32x32xf32, #tpu.memory_space<vmem>>, vector<32x32xf32>
    %cst = arith.constant dense<0.000000e+00> : vector<8x32xf32>
    %3 = tpu.matmul %0, %1, %cst {dimension_numbers = #tpu.dot_dimension_numbers<[1], [0], [0], [1], [0, 0, 1, 1], [], []>} : vector<8x32xf32>, vector<32x32xf32>, vector<8x32xf32> -> vector<8x32xf32>
    %c0_5 = arith.constant 0 : index
    %c0_6 = arith.constant 0 : index
    %4 = vector.load %arg3[%c0_5, %c0_6] : memref<1x32xf32, #tpu.memory_space<vmem>>, vector<1x32xf32>
    %5 = vector.broadcast %4 : vector<1x32xf32> to vector<8x32xf32>
    %6 = arith.addf %3, %5 : vector<8x32xf32>
    %cst_7 = arith.constant 0.000000e+00 : f32
    %7 = vector.broadcast %cst_7 : f32 to vector<8x32xf32>
    %8 = arith.maximumf %6, %7 : vector<8x32xf32>
    %cst_8 = arith.constant dense<0.000000e+00> : vector<8x32xf32>
    %9 = tpu.matmul %8, %2, %cst_8 {dimension_numbers = #tpu.dot_dimension_numbers<[1], [0], [0], [1], [0, 0, 1, 1], [], []>} : vector<8x32xf32>, vector<32x32xf32>, vector<8x32xf32> -> vector<8x32xf32>
    %c0_9 = arith.constant 0 : index
    %c0_10 = arith.constant 0 : index
    %10 = vector.load %arg5[%c0_9, %c0_10] : memref<1x32xf32, #tpu.memory_space<vmem>>, vector<1x32xf32>
    %11 = vector.broadcast %10 : vector<1x32xf32> to vector<8x32xf32>
    %12 = arith.addf %9, %11 : vector<8x32xf32>
    %cst_11 = arith.constant 0.000000e+00 : f32
    %13 = vector.broadcast %cst_11 : f32 to vector<8x32xf32>
    %14 = arith.maximumf %12, %13 : vector<8x32xf32>
    %c0_12 = arith.constant 0 : index
    %c0_13 = arith.constant 0 : index
    %15 = vector.load %arg6[%c0_12, %c0_13] : memref<1x32xf32, #tpu.memory_space<vmem>>, vector<1x32xf32>
    %16 = vector.broadcast %15 : vector<1x32xf32> to vector<8x32xf32>
    %17 = arith.mulf %14, %16 : vector<8x32xf32>
    %cst_14 = arith.constant dense<0.000000e+00> : vector<8xf32>
    %18 = vector.multi_reduction <add>, %17, %cst_14 [1] : vector<8x32xf32> to vector<8xf32>
    %19 = vector.shape_cast %18 : vector<8xf32> to vector<8x1xf32>
    %c0_15 = arith.constant 0 : index
    %c0_16 = arith.constant 0 : index
    %20 = vector.load %arg7[%c0_15, %c0_16] : memref<1x1xf32, #tpu.memory_space<vmem>>, vector<1x1xf32>
    %21 = vector.broadcast %20 : vector<1x1xf32> to vector<8x1xf32>
    %22 = arith.addf %19, %21 : vector<8x1xf32>
    %cst_17 = arith.constant 0.000000e+00 : f32
    %23 = vector.broadcast %cst_17 : f32 to vector<8x1xf32>
    %24 = arith.maximumf %22, %23 : vector<8x1xf32>
    %25 = vector.broadcast %cst_17 : f32 to vector<8x1xf32>
    %26 = arith.subf %22, %25 : vector<8x1xf32>
    %27 = arith.cmpf one, %26, %26 : vector<8x1xf32>
    %28 = vector.broadcast %cst_17 : f32 to vector<8x1xf32>
    %29 = arith.addf %22, %28 : vector<8x1xf32>
    %30 = math.absf %26 : vector<8x1xf32>
    %cst_18 = arith.constant 0.000000e+00 : f32
    %31 = vector.broadcast %cst_18 : f32 to vector<8x1xf32>
    %32 = arith.subf %31, %30 : vector<8x1xf32>
    %33 = math.exp %32 : vector<8x1xf32>
    %34 = math.log1p %33 : vector<8x1xf32>
    %35 = arith.addf %24, %34 : vector<8x1xf32>
    %36 = arith.select %27, %29, %35 : vector<8x1xi1>, vector<8x1xf32>
    %c0_19 = arith.constant 0 : index
    %c0_20 = arith.constant 0 : index
    %37 = vector.load %arg8[%c0_19, %c0_20] : memref<8x1xf32, #tpu.memory_space<vmem>>, vector<8x1xf32>
    tpu.vector_store %arg8[%c0_19, %c0_20], %36 {strides = array<i32>} : memref<8x1xf32, #tpu.memory_space<vmem>>, vector<8x1xf32>,
    return
  }
  func.func @transform_0(%arg0: i32) -> (i32, i32) {
    %c0_i32 = arith.constant 0 : i32
    %c0_i32_0 = arith.constant 0 : i32
    return %arg0, %c0_i32 : i32, i32
  }
  func.func @transform_1(%arg0: i32) -> (i32, i32) {
    %c0_i32 = arith.constant 0 : i32
    %c0_i32_0 = arith.constant 0 : i32
    %c0_i32_1 = arith.constant 0 : i32
    return %c0_i32, %c0_i32_0 : i32, i32
  }
  func.func @transform_2(%arg0: i32) -> (i32, i32) {
    %c0_i32 = arith.constant 0 : i32
    %c0_i32_0 = arith.constant 0 : i32
    %c0_i32_1 = arith.constant 0 : i32
    return %c0_i32, %c0_i32_0 : i32, i32
  }
  func.func @transform_3(%arg0: i32) -> (i32, i32) {
    %c0_i32 = arith.constant 0 : i32
    %c0_i32_0 = arith.constant 0 : i32
    %c0_i32_1 = arith.constant 0 : i32
    return %c0_i32, %c0_i32_0 : i32, i32
  }
  func.func @transform_4(%arg0: i32) -> (i32, i32) {
    %c0_i32 = arith.constant 0 : i32
    %c0_i32_0 = arith.constant 0 : i32
    %c0_i32_1 = arith.constant 0 : i32
    return %c0_i32, %c0_i32_0 : i32, i32
  }
  func.func @transform_5(%arg0: i32) -> (i32, i32) {
    %c0_i32 = arith.constant 0 : i32
    %c0_i32_0 = arith.constant 0 : i32
    %c0_i32_1 = arith.constant 0 : i32
    return %c0_i32, %c0_i32_0 : i32, i32
  }
  func.func @transform_6(%arg0: i32) -> (i32, i32) {
    %c0_i32 = arith.constant 0 : i32
    %c0_i32_0 = arith.constant 0 : i32
    %c0_i32_1 = arith.constant 0 : i32
    return %c0_i32, %c0_i32_0 : i32, i32
  }
  func.func @transform_7(%arg0: i32) -> (i32, i32) {
    %c0_i32 = arith.constant 0 : i32
    %c0_i32_0 = arith.constant 0 : i32
    return %arg0, %c0_i32 : i32, i32
  }
}

</mosaic_0001>

<llo_original>
// kernel: tpu_custom_call.1
$region0: #{tpu_custom_call.1}
  #allocation0 [shape = 'u32[]', space=smem, size = 0x4, offset = 0x4, fixed_abs, tag = 'smem constant byte address 0x4 - core index']
  #allocation1 [shape = 'u32[144,128]{1,0:T(1,128)}', space=vmem, size = 0x12000, scoped, tag = 'internal scratch']
  #allocation2 [shape = 'f32[1,1]{1,0:T(1,128)S(1)}', space=vmem, size = 0x200, scoped, tag = 'scoped memory for tpu_custom_call.1']
  %s0 = inlined_call_operand.hbm [shape: f32[8,32], index: 0, kind: input, shape index: {}]
  %s1 = inlined_call_operand.hbm [shape: f32[32,32], index: 1, kind: input, shape index: {}]
  %s2 = inlined_call_operand.vmem [shape: f32[1,32], index: 2, kind: input, shape index: {}]
  %s3 = inlined_call_operand.hbm [shape: f32[32,32], index: 3, kind: input, shape index: {}]
  %s4 = inlined_call_operand.vmem [shape: f32[1,32], index: 4, kind: input, shape index: {}]
  %s5 = inlined_call_operand.vmem [shape: f32[1,32], index: 5, kind: input, shape index: {}]
  %s6 = inlined_call_operand.<no memory space> [shape: f32[1,1], index: 6, kind: input, shape index: {}]
  %s7 = inlined_call_operand.vmem [shape: f32[8,1], index: 7, kind: output, shape index: {}]
  %s8 = sld [smem:[#allocation0]]
  $region50: #{tpu_custom_call.1} parent=0
    _
  %s10 = ssub.s32 1, %s8
  %s11 = scalar_select 0, %s10, %s8
  %v12 = vstv %s6
  %13 = vst [vmem:[#allocation2] sm:$0x1] %v12
  $region1: #{tpu_custom_call.1} parent=0
    #allocation3 [shape = 'u8[4096]{0}', space=vmem, size = 0x1000, scoped, tag = 'input window, operand 0, single buffered']
    #allocation4 [shape = 's32[1]{0}', space=sflag, size = 0x4, scoped, tag = 'scoped memory for tpu_custom_call.1']
    #allocation5 [shape = 'u8[16384]{0}', space=vmem, size = 0x4000, scoped, tag = 'input window, operand 1, single buffered']
    #allocation6 [shape = 's32[1]{0}', space=sflag, size = 0x4, scoped, tag = 'scoped memory for tpu_custom_call.1']
    #allocation7 [shape = 'u8[16384]{0}', space=vmem, size = 0x4000, scoped, tag = 'input window, operand 3, single buffered']
    %14 = vsyncpa [#allocation4], 0
    %15 = vsyncpa [#allocation6], 0
    // Predicated region
    $region2: #{tpu_custom_call.1} parent=1 // pred_check
      _
    $region3: #{tpu_custom_call.1} parent=1 // pred_check_branch
      %17 = sbr.rel (0) target = $region5
    $region4: #{tpu_custom_call.1} parent=1 // pred_region
      %s19 = ssub.s32 128, 128
      %20 = vsyncadd [#allocation4], %s19
      %s22 = sshll.u32 [#allocation3], 4
      %s23 = int_to_ptr.vmem [resolvable:$true] %s22
      %25 = dma.hbm_to_vmem [thread:$0]  %s0, 128, %s23, [#allocation4]
    $region5: #{tpu_custom_call.1} parent=1 // pred_fallthru
      _
    // Predicated region
    $region6: #{tpu_custom_call.1} parent=1 // pred_check
      _
    $region7: #{tpu_custom_call.1} parent=1 // pred_check_branch
      %27 = sbr.rel (0) target = $region9
    $region8: #{tpu_custom_call.1} parent=1 // pred_region
      %s29 = ssub.s32 512, 512
      %30 = vsyncadd [#allocation6], %s29
      %s31 = sshll.u32 [#allocation5], 4
      %s32 = int_to_ptr.vmem [resolvable:$true] %s31
      %37 = dma.hbm_to_vmem [thread:$0]  %s1, 512, %s32, [#allocation6], 128, 128, 8
    $region9: #{tpu_custom_call.1} parent=1 // pred_fallthru
      _
    // Predicated region
    $region10: #{tpu_custom_call.1} parent=1 // pred_check
      _
    $region11: #{tpu_custom_call.1} parent=1 // pred_check_branch
      %39 = sbr.rel (0) target = $region13
    $region12: #{tpu_custom_call.1} parent=1 // pred_region
      _
    $region13: #{tpu_custom_call.1} parent=1 // pred_fallthru
      _
    // Predicated region
    $region14: #{tpu_custom_call.1} parent=1 // pred_check
      _
    $region15: #{tpu_custom_call.1} parent=1 // pred_check_branch
      %41 = sbr.rel (0) target = $region17
    $region16: #{tpu_custom_call.1} parent=1 // pred_region
      %s43 = ssub.s32 512, 512
      %44 = vsyncadd [#allocation6], %s43
      %s45 = sshll.u32 [#allocation7], 4
      %s46 = int_to_ptr.vmem [resolvable:$true] %s45
      %51 = dma.hbm_to_vmem [thread:$0]  %s3, 512, %s46, [#allocation6], 128, 128, 8
    $region17: #{tpu_custom_call.1} parent=1 // pred_fallthru
      _
    // Predicated region
    $region18: #{tpu_custom_call.1} parent=1 // pred_check
      _
    $region19: #{tpu_custom_call.1} parent=1 // pred_check_branch
      %53 = sbr.rel (0) target = $region21
    $region20: #{tpu_custom_call.1} parent=1 // pred_region
      _
    $region21: #{tpu_custom_call.1} parent=1 // pred_fallthru
      _
    // Predicated region
    $region22: #{tpu_custom_call.1} parent=1 // pred_check
      _
    $region23: #{tpu_custom_call.1} parent=1 // pred_check_branch
      %55 = sbr.rel (0) target = $region25
    $region24: #{tpu_custom_call.1} parent=1 // pred_region
      _
    $region25: #{tpu_custom_call.1} parent=1 // pred_fallthru
      _
    // Predicated region
    $region26: #{tpu_custom_call.1} parent=1 // pred_check
      _
    $region27: #{tpu_custom_call.1} parent=1 // pred_check_branch
      %57 = sbr.rel (0) target = $region29
    $region28: #{tpu_custom_call.1} parent=1 // pred_region
      _
    $region29: #{tpu_custom_call.1} parent=1 // pred_fallthru
      _
    // Predicated region
    $region30: #{tpu_custom_call.1} parent=1 // pred_check
      _
    $region31: #{tpu_custom_call.1} parent=1 // pred_check_branch
      %59 = sbr.rel (0) target = $region33
    $region32: #{tpu_custom_call.1} parent=1 // pred_region
      %60 = dma.done [#allocation4], 128
    $region33: #{tpu_custom_call.1} parent=1 // pred_fallthru
      _
    // Predicated region
    $region34: #{tpu_custom_call.1} parent=1 // pred_check
      _
    $region35: #{tpu_custom_call.1} parent=1 // pred_check_branch
      %62 = sbr.rel (0) target = $region37
    $region36: #{tpu_custom_call.1} parent=1 // pred_region
      %63 = dma.done [#allocation6], 512
    $region37: #{tpu_custom_call.1} parent=1 // pred_fallthru
      _
    // Predicated region
    $region38: #{tpu_custom_call.1} parent=1 // pred_check
      _
    $region39: #{tpu_custom_call.1} parent=1 // pred_check_branch
      %65 = sbr.rel (0) target = $region41
    $region40: #{tpu_custom_call.1} parent=1 // pred_region
      %66 = dma.done [#allocation6], 512
    $region41: #{tpu_custom_call.1} parent=1 // pred_fallthru
      _
    %v67 = vld [vmem:[#allocation3] sm:$0xff]
    %v68 = vld [vmem:[#allocation5] sm:$0xff]
    %v69 = vld [vmem:[#allocation5 + $0x8] sm:$0xff]
    %v70 = vld [vmem:[#allocation5 + $0x10] sm:$0xff]
    %v71 = vld [vmem:[#allocation5 + $0x18] sm:$0xff]
    %v72 = vld [vmem:[#allocation7] sm:$0xff]
    %v73 = vld [vmem:[#allocation7 + $0x8] sm:$0xff]
    %v74 = vld [vmem:[#allocation7 + $0x10] sm:$0xff]
    %v75 = vld [vmem:[#allocation7 + $0x18] sm:$0xff]
    %v76 = vld [vmem:[%s2] sm:$0x1]
    %v78 = vlaneseq
    %v79 = vshrl.u32 %v78, 7
    %v80 = vsub.s32 0, %v79
    %v81 = vrot.slane %v76, %v80
    %vm83 = vcmask 261120
    %v85 = vsel %vm83, %v67, 0
    %87 = vmatprep.subr.mxu0 0.0
    %88 = vmatpush1.msra.mxu0 0.0
    %89 = vmatprep.subr.mxu0 0.0
    %90 = vmatpush1.msra.mxu0 0.0
    %91 = vmatprep.subr.mxu0 0.0
    %92 = vmatpush1.msra.mxu0 0.0
    %93 = vmatprep.subr.mxu0 0.0
    %94 = vmatpush1.msra.mxu0 0.0
    %95 = vmatprep.subr.mxu0 0.0
    %96 = vmatpush1.msra.mxu0 0.0
    %97 = vmatprep.subr.mxu0 0.0
    %98 = vmatpush1.msra.mxu0 0.0
    %99 = vmatprep.subr.mxu0 0.0
    %100 = vmatpush1.msra.mxu0 0.0
    %101 = vmatprep.subr.mxu0 0.0
    %102 = vmatpush1.msra.mxu0 0.0
    %103 = vmatprep.subr.mxu0 0.0
    %104 = vmatpush1.msra.mxu0 0.0
    %105 = vmatprep.subr.mxu0 0.0
    %106 = vmatpush1.msra.mxu0 0.0
    %107 = vmatprep.subr.mxu0 0.0
    %108 = vmatpush1.msra.mxu0 0.0
    %109 = vmatprep.subr.mxu0 0.0
    %110 = vmatpush1.msra.mxu0 0.0
    %111 = vmatprep.subr.mxu0 0.0
    %112 = vmatpush1.msra.mxu0 %v71
    %113 = vmatprep.subr.mxu0 0.0
    %114 = vmatpush1.msra.mxu0 %v70
    %115 = vmatprep.subr.mxu0 0.0
    %116 = vmatpush1.msra.mxu0 %v69
    %117 = vmatprep.subr.mxu0 0.0
    %118 = vmatpush1.msra.mxu0 %v68
    %119 = vmatprep.subr.mxu0 0.0
    %120 = vmatpush2.msra.mxu0 0.0
    %121 = vmatprep.subr.mxu0 0.0
    %122 = vmatpush2.msra.mxu0 0.0
    %123 = vmatprep.subr.mxu0 0.0
    %124 = vmatpush2.msra.mxu0 0.0
    %125 = vmatprep.subr.mxu0 0.0
    %126 = vmatpush2.msra.mxu0 0.0
    %127 = vmatprep.subr.mxu0 0.0
    %128 = vmatpush2.msra.mxu0 0.0
    %129 = vmatprep.subr.mxu0 0.0
    %130 = vmatpush2.msra.mxu0 0.0
    %131 = vmatprep.subr.mxu0 0.0
    %132 = vmatpush2.msra.mxu0 0.0
    %133 = vmatprep.subr.mxu0 0.0
    %134 = vmatpush2.msra.mxu0 0.0
    %135 = vmatprep.subr.mxu0 0.0
    %136 = vmatpush2.msra.mxu0 0.0
    %137 = vmatprep.subr.mxu0 0.0
    %138 = vmatpush2.msra.mxu0 0.0
    %139 = vmatprep.subr.mxu0 0.0
    %140 = vmatpush2.msra.mxu0 0.0
    %141 = vmatprep.subr.mxu0 0.0
    %142 = vmatpush2.msra.mxu0 0.0
    %143 = vmatprep.subr.mxu0 0.0
    %144 = vmatpush2.msra.mxu0 0.0
    %145 = vmatprep.subr.mxu0 0.0
    %146 = vmatpush2.msra.mxu0 0.0
    %147 = vmatprep.subr.mxu0 0.0
    %148 = vmatpush2.msra.mxu0 0.0
    %149 = vmatprep.subr.mxu0 0.0
    %150 = vmatpush2.msra.mxu0 0.0
    %151 = vmatprep.mubr.f32.mxu0 0.0
    %152 = vmatmul.mubr.f32.gmra.mxu0 %v85
    %v153 = vpop.f32.mrf.mxu0
    %v154 = vadd.f32 %v81, %v153
    %v155 = vpop.f32.mrf.mxu0
    %156 = vdwg.mxu0
    %v157 = vmax.f32 %v154, 0.0
    %v158 = vld [vmem:[%s4] sm:$0x1]
    %v160 = vlaneseq
    %v161 = vshrl.u32 %v160, 7
    %v162 = vsub.s32 0, %v161
    %v163 = vrot.slane %v158, %v162
    %v166 = vsel %vm83, %v157, 0
    %168 = vmatprep.subr.mxu0 0.0
    %169 = vmatpush1.msra.mxu0 0.0
    %170 = vmatprep.subr.mxu0 0.0
    %171 = vmatpush1.msra.mxu0 0.0
    %172 = vmatprep.subr.mxu0 0.0
    %173 = vmatpush1.msra.mxu0 0.0
    %174 = vmatprep.subr.mxu0 0.0
    %175 = vmatpush1.msra.mxu0 0.0
    %176 = vmatprep.subr.mxu0 0.0
    %177 = vmatpush1.msra.mxu0 0.0
    %178 = vmatprep.subr.mxu0 0.0
    %179 = vmatpush1.msra.mxu0 0.0
    %180 = vmatprep.subr.mxu0 0.0
    %181 = vmatpush1.msra.mxu0 0.0
    %182 = vmatprep.subr.mxu0 0.0
    %183 = vmatpush1.msra.mxu0 0.0
    %184 = vmatprep.subr.mxu0 0.0
    %185 = vmatpush1.msra.mxu0 0.0
    %186 = vmatprep.subr.mxu0 0.0
    %187 = vmatpush1.msra.mxu0 0.0
    %188 = vmatprep.subr.mxu0 0.0
    %189 = vmatpush1.msra.mxu0 0.0
    %190 = vmatprep.subr.mxu0 0.0
    %191 = vmatpush1.msra.mxu0 0.0
    %192 = vmatprep.subr.mxu0 0.0
    %193 = vmatpush1.msra.mxu0 %v75
    %194 = vmatprep.subr.mxu0 0.0
    %195 = vmatpush1.msra.mxu0 %v74
    %196 = vmatprep.subr.mxu0 0.0
    %197 = vmatpush1.msra.mxu0 %v73
    %198 = vmatprep.subr.mxu0 0.0
    %199 = vmatpush1.msra.mxu0 %v72
    %200 = vmatprep.subr.mxu0 0.0
    %201 = vmatpush2.msra.mxu0 0.0
    %202 = vmatprep.subr.mxu0 0.0
    %203 = vmatpush2.msra.mxu0 0.0
    %204 = vmatprep.subr.mxu0 0.0
    %205 = vmatpush2.msra.mxu0 0.0
    %206 = vmatprep.subr.mxu0 0.0
    %207 = vmatpush2.msra.mxu0 0.0
    %208 = vmatprep.subr.mxu0 0.0
    %209 = vmatpush2.msra.mxu0 0.0
    %210 = vmatprep.subr.mxu0 0.0
    %211 = vmatpush2.msra.mxu0 0.0
    %212 = vmatprep.subr.mxu0 0.0
    %213 = vmatpush2.msra.mxu0 0.0
    %214 = vmatprep.subr.mxu0 0.0
    %215 = vmatpush2.msra.mxu0 0.0
    %216 = vmatprep.subr.mxu0 0.0
    %217 = vmatpush2.msra.mxu0 0.0
    %218 = vmatprep.subr.mxu0 0.0
    %219 = vmatpush2.msra.mxu0 0.0
    %220 = vmatprep.subr.mxu0 0.0
    %221 = vmatpush2.msra.mxu0 0.0
    %222 = vmatprep.subr.mxu0 0.0
    %223 = vmatpush2.msra.mxu0 0.0
    %224 = vmatprep.subr.mxu0 0.0
    %225 = vmatpush2.msra.mxu0 0.0
    %226 = vmatprep.subr.mxu0 0.0
    %227 = vmatpush2.msra.mxu0 0.0
    %228 = vmatprep.subr.mxu0 0.0
    %229 = vmatpush2.msra.mxu0 0.0
    %230 = vmatprep.subr.mxu0 0.0
    %231 = vmatpush2.msra.mxu0 0.0
    %232 = vmatprep.mubr.f32.mxu0 0.0
    %233 = vmatmul.mubr.f32.gmra.mxu0 %v166
    %v234 = vpop.f32.mrf.mxu0
    %v235 = vadd.f32 %v163, %v234
    %v236 = vpop.f32.mrf.mxu0
    %237 = vdwg.mxu0
    %v238 = vmax.f32 %v235, 0.0
    %v239 = vld [vmem:[%s5] sm:$0x1]
    %v241 = vlaneseq
    %v242 = vshrl.u32 %v241, 7
    %v243 = vsub.s32 0, %v242
    %v244 = vrot.slane %v239, %v243
    %v246 = vmul.f32 %v238, %v244
    %v247 = vsel %vm83, %v246, 0.0
    %248 = vadd.xlane.f32.xlu0 %v247
    %v249 = vpop.xlane.xlu0 %248
    %v250 = vld [vmem:[#allocation2] sm:$0x1]
    %v252 = vlaneseq
    %v253 = vshrl.u32 %v252, 7
    %v254 = vsub.s32 0, %v253
    %v255 = vrot.slane %v250, %v254
    %v257 = vadd.f32 %v249, %v255
    %v258 = vmax.f32 %v257, 0.0
    %vm259 = vcmp.ne.f32.partialorder %v257, %v257
    %v260 = vadd.f32 %v257, 0.0
    %v261 = vand.u32 2147483647, %v257
    %v262 = vsub.f32 0.0, %v261
    %v263 = vmul.f32 %v262, 1.442695
    %v264 = vpow.pop %v263
    %v265 = vadd.f32 %v264, 1.0
    %v266 = vlog2.pop %v265
    %v267 = vmul.f32 %v266, 0.6931472
    %v268 = vmul.f32 -0.5, %v264
    %v269 = vadd.f32 %v268, 1.0
    %v270 = vmul.f32 %v269, %v264
    %v271 = vand.u32 2147483647, %v264
    %vm272 = vcmp.lt.f32.partialorder %v271, 0.0004427343
    %v273 = vsel %vm272, %v270, %v267
    %v274 = vadd.f32 %v258, %v273
    %v275 = vsel %vm259, %v260, %v274
    %vm276 = vcmask 7168
    %277 = vst.msk [vmem:[%s7] sm:$0xff] %vm276, %v275
    // Predicated region
    $region42: #{tpu_custom_call.1} parent=1 // pred_check
      _
    $region43: #{tpu_custom_call.1} parent=1 // pred_check_branch
      %279 = sbr.rel (0) target = $region45
    $region44: #{tpu_custom_call.1} parent=1 // pred_region
      _
    $region45: #{tpu_custom_call.1} parent=1 // pred_fallthru
      _
    // Predicated region
    $region46: #{tpu_custom_call.1} parent=1 // pred_check
      _
    $region47: #{tpu_custom_call.1} parent=1 // pred_check_branch
      %281 = sbr.rel (0) target = $region49
    $region48: #{tpu_custom_call.1} parent=1 // pred_region
      _
    $region49: #{tpu_custom_call.1} parent=1 // pred_fallthru
      _
    %282 = vsyncpa [#allocation4], 1
    %283 = vsyncpa [#allocation6], 1

</llo_original>
